<compile_context>
chip_gen: v5e
topology: v5e:2x2
jax: 0.10.0
libtpu: 0.0.40
codegen_flags: <defaults>
</compile_context>

<pallas_src>
import functools

import jax
import jax.numpy as jnp
from jax import lax
from jax.experimental import pallas as pl
from jax.experimental.pallas import tpu as pltpu


def _round_up(n, m):
    return (n + m - 1) // m * m


def _vmem_limit_bytes():
    """Per-chip VMEM budget: 96 MiB on v5e/v6e (128 MiB phys), 48 MiB on v7x."""
    try:
        kind = jax.devices()[0].device_kind.lower()
    except Exception:
        kind = ""
    if "v2" in kind or "v3" in kind:
        return 12 * 1024 * 1024
    if "v5" in kind or "v6" in kind:
        return 96 * 1024 * 1024
    return 48 * 1024 * 1024  # v7x (64 MiB / TC) and unknown chips


# ---------------------------------------------------------------------------
# Kernels
# ---------------------------------------------------------------------------
def _project_kernel(x_ref, wt_ref, dinv_ref, g0_ref):
    """G0 = D^-1/2 (X @ W^T): project to the tiny class dim before propagation."""
    xw = jnp.dot(x_ref[...], wt_ref[...], preferred_element_type=jnp.float32)
    g0_ref[...] = (dinv_ref[...] * xw).astype(g0_ref.dtype)


def _prop_kernel(mask_ref, col_ref, adj_ref, h_ref, scale_ref, *rest,
                 TK, C, h_resident, apply_epilogue):
    """One propagation step: rows(scale) * ((A+I) @ G_k); last step fuses
    bias-add + masked log_softmax."""
    if apply_epilogue:
        b_ref, out_ref, acc_ref = rest
    else:
        out_ref, acc_ref = rest

    i = pl.program_id(0)
    j = pl.program_id(1)  # contraction-tile index ("arbitrary" axis)

    @pl.when(j == 0)
    def _():
        acc_ref[...] = jnp.zeros_like(acc_ref)

    # Skip the MXU work for all-zero adjacency tiles.  Their DMA was already
    # skipped because the adjacency index_map re-used the previous block index.
    @pl.when(mask_ref[i, j] != 0)
    def _():
        if h_resident:
            off = pl.multiple_of(j * TK, TK)
            h_blk = h_ref[pl.ds(off, TK), :]
        else:
            h_blk = h_ref[...]
        # int8 counts -> bf16 (exact), f32 storage -> bf16 MXU inputs,
        # f32 accumulation.
        acc_ref[...] += jnp.dot(
            adj_ref[...].astype(jnp.bfloat16),
            h_blk.astype(jnp.bfloat16),
            preferred_element_type=jnp.float32)

    @pl.when(j == pl.num_programs(1) - 1)
    def _():
        res = scale_ref[...] * acc_ref[...]      # fold D^-1/2 back in (f32)
        if apply_epilogue:
            logits = res + b_ref[...]
            # Mask padded class lanes so they don't pollute the softmax.
            col = lax.broadcasted_iota(jnp.int32, logits.shape, 1)
            logits = jnp.where(col < C, logits, -jnp.inf)
            m = jnp.max(logits, axis=1, keepdims=True)
            shifted = logits - m
            lse = jnp.log(jnp.sum(jnp.exp(shifted), axis=1, keepdims=True))
            out_ref[...] = (shifted - lse).astype(out_ref.dtype)
        else:
            out_ref[...] = res.astype(out_ref.dtype)


# ---------------------------------------------------------------------------
# Glue + wrapper
# ---------------------------------------------------------------------------
def _build_normalized_graph(edge_index, N):
    """Dense (A + I) edge counts [N, N] and D^-1/2 [N] (one-time glue)."""
    src, dst = edge_index[0], edge_index[1]
    counts = jnp.zeros((N, N), jnp.float32).at[dst, src].add(1.0)  # edge j->i
    counts = counts + jnp.eye(N, dtype=jnp.float32)                # self-loops
    deg = counts.sum(axis=1)
    dinv = jnp.where(deg > 0, lax.rsqrt(deg), 0.0)
    return counts, dinv


def sgc_forward(x, edge_index, w, b, K):
    """SGC forward: log_softmax(A_hat^K X W^T + b). w is [C, F] (nn.Linear)."""
    assert K >= 1, "SGConv propagation count K must be >= 1"
    N, F = x.shape
    C = w.shape[0]

    counts, dinv = _build_normalized_graph(edge_index, N)

    # ---- padding / tiling choices -----------------------------------------
    C_PAD = _round_up(C, 128)                  # lane-dense class slab
    F_PAD = _round_up(F, 128)                  # clean (8,128) projection tiles
    Nr = _round_up(N, 128)
    if Nr <= 2048:
        TM = TK = Nr                           # whole problem in one tile pair
    else:
        TM, TK = 2048, 1024                    # decoupled row / contraction tiles
    N_pad = _round_up(N, max(TM, TK))
    n_row = N_pad // TM
    # v7x megacore: keep the "parallel" row axis even so both TCs stay busy.
    if n_row > 1 and n_row % 2 == 1:
        N_pad += TM                            # TM % TK == 0, so n_k stays whole
        n_row += 1
    n_k = N_pad // TK

    VMEM_LIMIT = _vmem_limit_bytes()
    # Keep G_k fully resident in VMEM across the contraction axis when it fits
    # (removes the redundant per-row-tile H re-stream); otherwise stream it.
    fixed_vmem = 2 * TM * TK + 3 * TM * C_PAD * 4 + (2 << 20)
    h_resident = (2 * N_pad * C_PAD * 4) <= max(VMEM_LIMIT - fixed_vmem, 0)

    # ---- operand padding ----------------------------------------------------
    # int8 exact edge counts; D^-1/2 folded out as rank-1 row scaling.
    adj_p = jnp.pad(counts, ((0, N_pad - N), (0, N_pad - N))).astype(jnp.int8)
    # TODO(synk): int8 overflows for >127 duplicate edges between one node pair.
    x_p = jnp.pad(x.astype(jnp.bfloat16), ((0, N_pad - N), (0, F_PAD - F)))
    wt_p = jnp.pad(w.T.astype(jnp.bfloat16), ((0, F_PAD - F), (0, C_PAD - C)))
    b_p = jnp.pad(b.astype(jnp.float32).reshape(1, C), ((0, 0), (0, C_PAD - C)))
    dinv_p = jnp.pad(dinv.astype(jnp.float32), (0, N_pad - N)).reshape(N_pad, 1)
    dinv_sq_p = dinv_p * dinv_p

    # Block-sparse tile metadata (scalar-prefetched into SMEM): nonzero map and
    # "column tile to fetch" table.  An empty tile keeps the previously fetched
    # block index so its adjacency DMA is skipped by the pipeline.
    tile_nnz = (adj_p != 0).reshape(n_row, TM, n_k, TK).any(axis=(1, 3))
    tile_mask = tile_nnz.astype(jnp.int32)
    cand = jnp.where(tile_nnz, jnp.arange(n_k, dtype=jnp.int32)[None, :], -1)
    tile_col = jnp.maximum(lax.cummax(cand, axis=1), 0).astype(jnp.int32)

    # ---- 1) projection: G0 = D^-1/2 (X @ W^T) ------------------------------
    h = pl.pallas_call(
        _project_kernel,
        out_shape=jax.ShapeDtypeStruct((N_pad, C_PAD), jnp.float32),
        grid_spec=pltpu.PrefetchScalarGridSpec(
            num_scalar_prefetch=0,
            grid=(n_row,),
            in_specs=[pl.BlockSpec((TM, F_PAD), lambda i: (i, 0)),
                      pl.BlockSpec((F_PAD, C_PAD), lambda i: (0, 0)),
                      pl.BlockSpec((TM, 1), lambda i: (i, 0))],
            out_specs=pl.BlockSpec((TM, C_PAD), lambda i: (i, 0)),
        ),
        compiler_params=pltpu.CompilerParams(
            dimension_semantics=("parallel",),
            vmem_limit_bytes=VMEM_LIMIT),
        cost_estimate=pl.CostEstimate(
            flops=2 * N_pad * F_PAD * C_PAD,
            transcendentals=0,
            bytes_accessed=(N_pad * F_PAD * 2 + F_PAD * C_PAD * 2
                            + N_pad * 4 + N_pad * C_PAD * 4)),
    )(x_p, wt_p, dinv_p)

    # ---- 2) K propagation steps on the [N_pad, C_PAD] matrix ---------------
    for k in range(K):
        last = (k == K - 1)
        scale = dinv_p if last else dinv_sq_p   # dinv on the last hop, dinv^2 before

        if h_resident:
            h_spec = pl.BlockSpec((N_pad, C_PAD), lambda i, j, m, c: (0, 0))
        else:
            h_spec = pl.BlockSpec((TK, C_PAD), lambda i, j, m, c: (c[i, j], 0))

        in_specs = [
            pl.BlockSpec((TM, TK), lambda i, j, m, c: (i, c[i, j])),   # (A+I) counts
            h_spec,                                                    # G_k
            pl.BlockSpec((TM, 1), lambda i, j, m, c: (i, 0)),          # row scale
        ]
        operands = [adj_p, h, scale]
        if last:   # bias only plumbed into the epilogue call
            in_specs.append(pl.BlockSpec((1, C_PAD), lambda i, j, m, c: (0, 0)))
            operands.append(b_p)

        kern = functools.partial(_prop_kernel, TK=TK, C=C,
                                 h_resident=h_resident, apply_epilogue=last)

        h_bytes = (N_pad * C_PAD * 4 if h_resident
                   else n_row * N_pad * C_PAD * 4)
        h = pl.pallas_call(
            kern,
            out_shape=jax.ShapeDtypeStruct((N_pad, C_PAD), jnp.float32),
            grid_spec=pltpu.PrefetchScalarGridSpec(
                num_scalar_prefetch=2,
                grid=(n_row, n_k),                       # (rows, contraction)
                in_specs=in_specs,
                out_specs=pl.BlockSpec((TM, C_PAD), lambda i, j, m, c: (i, 0)),
                scratch_shapes=[pltpu.VMEM((TM, C_PAD), jnp.float32)],
            ),
            compiler_params=pltpu.CompilerParams(
                dimension_semantics=("parallel", "arbitrary"),
                vmem_limit_bytes=VMEM_LIMIT),
            cost_estimate=pl.CostEstimate(
                flops=2 * N_pad * N_pad * C_PAD,
                transcendentals=(N_pad * C_PAD if last else 0),
                bytes_accessed=(N_pad * N_pad               # int8 adjacency
                                + h_bytes                   # G_k (resident/stream)
                                + N_pad * C_PAD * 4         # output
                                + N_pad * 4                 # row scale
                                + (C_PAD * 4 if last else 0))),
        )(tile_mask, tile_col, *operands)

    # Slice away row/class padding (lane-dense store happened inside the kernel).
    return h[:N, :C]


def _sgc_reference(x, edge_index, w, b, K):
    """Pure-JAX f32 reference for correctness."""
    N = x.shape[0]
    counts, dinv = _build_normalized_graph(edge_index, N)
    adj = dinv[:, None] * counts * dinv[None, :]
    h = x.astype(jnp.float32)
    for _ in range(K):
        h = adj @ h
    logits = h @ w.T + b[None, :]
    return jax.nn.log_softmax(logits, axis=1)


if __name__ == "__main__":
    # Small synthetic "dataset": N nodes, F features, C classes, K hops.
    N, F, C, K = 16, 8, 4, 2

    key = jax.random.PRNGKey(0)
    kx, kw = jax.random.split(key)

    # Node features.
    x = jax.random.normal(kx, (N, F), dtype=jnp.float32)

    # Deterministic undirected ring graph as edge_index [2, E].
    idx = jnp.arange(N)
    nxt = (idx + 1) % N
    edge_index = jnp.concatenate(
        [jnp.stack([idx, nxt], axis=0), jnp.stack([nxt, idx], axis=0)], axis=1
    ).astype(jnp.int32)

    # SGConv's internal Linear: glorot-uniform weight [C, F], zero bias [C].
    limit = (6.0 / (F + C)) ** 0.5
    w = jax.random.uniform(kw, (C, F), minval=-limit, maxval=limit,
                           dtype=jnp.float32)
    b = jnp.zeros((C,), dtype=jnp.float32)

    out = jax.block_until_ready(sgc_forward(x, edge_index, w, b, K))

    # Sanity 1: rows of exp(log_softmax) sum to 1 (f32 epilogue).
    row_sums = jnp.exp(out).sum(axis=1)
    assert out.shape == (N, C)
    assert bool(jnp.allclose(row_sums, 1.0, atol=1e-5))

    # Sanity 2: matches pure-JAX f32 reference (exact int8 adjacency + f32 H
    # storage -> only bf16-MXU-input rounding remains).
    ref = _sgc_reference(x, edge_index, w, b, K)
    assert bool(jnp.allclose(out, ref, atol=3e-2))

    print("KERNEL_OK")
</pallas_src>

<mosaic_0001>
module attributes {stable_mosaic.version = 11 : i64} {
  func.func @_project_kernel(%arg0: i32, %arg1: memref<128x128xbf16, #tpu.memory_space<vmem>>, %arg2: memref<128x128xbf16, #tpu.memory_space<vmem>>, %arg3: memref<128x1xf32, #tpu.memory_space<vmem>>, %arg4: memref<128x128xf32, #tpu.memory_space<vmem>>) attributes {dimension_semantics = [#tpu.dimension_semantics<parallel>], iteration_bounds = array<i64: 1>, scalar_prefetch = 0 : i64, scratch_operands = 0 : i64, tpu.core_type = #tpu.core_type<tc>, window_params = [{transform_indices = @transform_0, window_bounds = array<i64: 128, 128>}, {pipeline_mode = #tpu.pipeline_mode<synchronous>, transform_indices = @transform_1, window_bounds = array<i64: 128, 128>}, {transform_indices = @transform_2, window_bounds = array<i64: 128, 1>}, {transform_indices = @transform_3, window_bounds = array<i64: 128, 128>}]} {
    %c0 = arith.constant 0 : index
    %c0_0 = arith.constant 0 : index
    %0 = vector.load %arg1[%c0, %c0_0] : memref<128x128xbf16, #tpu.memory_space<vmem>>, vector<128x128xbf16>
    %c0_1 = arith.constant 0 : index
    %c0_2 = arith.constant 0 : index
    %1 = vector.load %arg2[%c0_1, %c0_2] : memref<128x128xbf16, #tpu.memory_space<vmem>>, vector<128x128xbf16>
    %cst = arith.constant dense<0.000000e+00> : vector<128x128xf32>
    %2 = tpu.matmul %0, %1, %cst {dimension_numbers = #tpu.dot_dimension_numbers<[1], [0], [0], [1], [0, 0, 1, 1], [], []>} : vector<128x128xbf16>, vector<128x128xbf16>, vector<128x128xf32> -> vector<128x128xf32>
    %c0_3 = arith.constant 0 : index
    %c0_4 = arith.constant 0 : index
    %3 = vector.load %arg3[%c0_3, %c0_4] : memref<128x1xf32, #tpu.memory_space<vmem>>, vector<128x1xf32>
    %4 = vector.broadcast %3 : vector<128x1xf32> to vector<128x128xf32>
    %5 = arith.mulf %4, %2 : vector<128x128xf32>
    %c0_5 = arith.constant 0 : index
    %c0_6 = arith.constant 0 : index
    %6 = vector.load %arg4[%c0_5, %c0_6] : memref<128x128xf32, #tpu.memory_space<vmem>>, vector<128x128xf32>
    tpu.vector_store %arg4[%c0_5, %c0_6], %5 {strides = array<i32>} : memref<128x128xf32, #tpu.memory_space<vmem>>, vector<128x128xf32>,
    return
  }
  func.func @transform_0(%arg0: i32) -> (i32, i32) {
    %c0_i32 = arith.constant 0 : i32
    %c0_i32_0 = arith.constant 0 : i32
    return %arg0, %c0_i32 : i32, i32
  }
  func.func @transform_1(%arg0: i32) -> (i32, i32) {
    %c0_i32 = arith.constant 0 : i32
    %c0_i32_0 = arith.constant 0 : i32
    %c0_i32_1 = arith.constant 0 : i32
    return %c0_i32, %c0_i32_0 : i32, i32
  }
  func.func @transform_2(%arg0: i32) -> (i32, i32) {
    %c0_i32 = arith.constant 0 : i32
    %c0_i32_0 = arith.constant 0 : i32
    return %arg0, %c0_i32 : i32, i32
  }
  func.func @transform_3(%arg0: i32) -> (i32, i32) {
    %c0_i32 = arith.constant 0 : i32
    %c0_i32_0 = arith.constant 0 : i32
    return %arg0, %c0_i32 : i32, i32
  }
}

</mosaic_0001>

<llo_original>
// kernel: tpu_custom_call.1
$region0: #{tpu_custom_call.1}
  #allocation0 [shape = 'u32[]', space=smem, size = 0x4, offset = 0x4, fixed_abs, tag = 'smem constant byte address 0x4 - core index']
  #allocation1 [shape = 'u32[72,128]{1,0:T(1,128)}', space=vmem, size = 0x9000, scoped, tag = 'internal scratch']
  %s0 = inlined_call_operand.vmem [shape: bf16[128,128], index: 0, kind: input, shape index: {}]
  %s1 = inlined_call_operand.vmem [shape: bf16[128,128], index: 1, kind: input, shape index: {}]
  %s2 = inlined_call_operand.vmem [shape: f32[128,1], index: 2, kind: input, shape index: {}]
  %s3 = inlined_call_operand.hbm [shape: f32[128,128], index: 3, kind: output, shape index: {}]
  %s4 = sld [smem:[#allocation0]]
  $region22: #{tpu_custom_call.1} parent=0
    _
  %s6 = ssub.s32 1, %s4
  %s7 = scalar_select 0, %s6, %s4
  $region1: #{tpu_custom_call.1} parent=0
    #allocation2 [shape = 'u8[65536]{0}', space=vmem, size = 0x10000, scoped, tag = 'output window, operand 0, single buffered']
    #allocation3 [shape = 's32[1]{0}', space=sflag, size = 0x4, scoped, tag = 'scoped memory for tpu_custom_call.1']
    %8 = vsyncpa [#allocation3], 0
    // Predicated region
    $region2: #{tpu_custom_call.1} parent=1 // pred_check
      _
    $region3: #{tpu_custom_call.1} parent=1 // pred_check_branch
      %10 = sbr.rel (0) target = $region5
    $region4: #{tpu_custom_call.1} parent=1 // pred_region
      _
    $region5: #{tpu_custom_call.1} parent=1 // pred_fallthru
      _
    // Predicated region
    $region6: #{tpu_custom_call.1} parent=1 // pred_check
      _
    $region7: #{tpu_custom_call.1} parent=1 // pred_check_branch
      %12 = sbr.rel (0) target = $region9
    $region8: #{tpu_custom_call.1} parent=1 // pred_region
      _
    $region9: #{tpu_custom_call.1} parent=1 // pred_fallthru
      _
    // Predicated region
    $region10: #{tpu_custom_call.1} parent=1 // pred_check
      _
    $region11: #{tpu_custom_call.1} parent=1 // pred_check_branch
      %14 = sbr.rel (0) target = $region13
    $region12: #{tpu_custom_call.1} parent=1 // pred_region
      _
    $region13: #{tpu_custom_call.1} parent=1 // pred_fallthru
      _
    %v15 = vld [vmem:[%s0] sm:$0xf]
    %v16 = vld [vmem:[%s0 + $0x4] sm:$0xf]
    %v17 = vld [vmem:[%s0 + $0x8] sm:$0xf]
    %v18 = vld [vmem:[%s0 + $0xc] sm:$0xf]
    %v19 = vld [vmem:[%s0 + $0x10] sm:$0xf]
    %v20 = vld [vmem:[%s0 + $0x14] sm:$0xf]
    %v21 = vld [vmem:[%s0 + $0x18] sm:$0xf]
    %v22 = vld [vmem:[%s0 + $0x1c] sm:$0xf]
    %v23 = vld [vmem:[%s0 + $0x20] sm:$0xf]
    %v24 = vld [vmem:[%s0 + $0x24] sm:$0xf]
    %v25 = vld [vmem:[%s0 + $0x28] sm:$0xf]
    %v26 = vld [vmem:[%s0 + $0x2c] sm:$0xf]
    %v27 = vld [vmem:[%s0 + $0x30] sm:$0xf]
    %v28 = vld [vmem:[%s0 + $0x34] sm:$0xf]
    %v29 = vld [vmem:[%s0 + $0x38] sm:$0xf]
    %v30 = vld [vmem:[%s0 + $0x3c] sm:$0xf]
    %v31 = vld [vmem:[%s1] sm:$0xf]
    %v32 = vld [vmem:[%s1 + $0x4] sm:$0xf]
    %v33 = vld [vmem:[%s1 + $0x8] sm:$0xf]
    %v34 = vld [vmem:[%s1 + $0xc] sm:$0xf]
    %v35 = vld [vmem:[%s1 + $0x10] sm:$0xf]
    %v36 = vld [vmem:[%s1 + $0x14] sm:$0xf]
    %v37 = vld [vmem:[%s1 + $0x18] sm:$0xf]
    %v38 = vld [vmem:[%s1 + $0x1c] sm:$0xf]
    %v39 = vld [vmem:[%s1 + $0x20] sm:$0xf]
    %v40 = vld [vmem:[%s1 + $0x24] sm:$0xf]
    %v41 = vld [vmem:[%s1 + $0x28] sm:$0xf]
    %v42 = vld [vmem:[%s1 + $0x2c] sm:$0xf]
    %v43 = vld [vmem:[%s1 + $0x30] sm:$0xf]
    %v44 = vld [vmem:[%s1 + $0x34] sm:$0xf]
    %v45 = vld [vmem:[%s1 + $0x38] sm:$0xf]
    %v46 = vld [vmem:[%s1 + $0x3c] sm:$0xf]
    %v63 = vunpack.c.l.b16 %v15
    %v64 = vunpack.c.l.b16 %v16
    %v65 = vunpack.c.l.b16 %v17
    %v66 = vunpack.c.l.b16 %v18
    %v67 = vunpack.c.l.b16 %v19
    %v68 = vunpack.c.l.b16 %v20
    %v69 = vunpack.c.l.b16 %v21
    %v70 = vunpack.c.l.b16 %v22
    %v71 = vunpack.c.l.b16 %v23
    %v72 = vunpack.c.l.b16 %v24
    %v73 = vunpack.c.l.b16 %v25
    %v74 = vunpack.c.l.b16 %v26
    %v75 = vunpack.c.l.b16 %v27
    %v76 = vunpack.c.l.b16 %v28
    %v77 = vunpack.c.l.b16 %v29
    %v78 = vunpack.c.l.b16 %v30
    %v79 = vpack.c.b16 %v64, %v63
    %v80 = vpack.c.b16 %v66, %v65
    %v81 = vpack.c.b16 %v68, %v67
    %v82 = vpack.c.b16 %v70, %v69
    %v83 = vpack.c.b16 %v72, %v71
    %v84 = vpack.c.b16 %v74, %v73
    %v85 = vpack.c.b16 %v76, %v75
    %v86 = vpack.c.b16 %v78, %v77
    %v111 = vunpack.c.l.b16 %v31
    %v112 = vunpack.c.l.b16 %v32
    %v113 = vunpack.c.l.b16 %v33
    %v114 = vunpack.c.l.b16 %v34
    %v115 = vunpack.c.l.b16 %v35
    %v116 = vunpack.c.l.b16 %v36
    %v117 = vunpack.c.l.b16 %v37
    %v118 = vunpack.c.l.b16 %v38
    %v119 = vunpack.c.l.b16 %v39
    %v120 = vunpack.c.l.b16 %v40
    %v121 = vunpack.c.l.b16 %v41
    %v122 = vunpack.c.l.b16 %v42
    %v123 = vunpack.c.l.b16 %v43
    %v124 = vunpack.c.l.b16 %v44
    %v125 = vunpack.c.l.b16 %v45
    %v126 = vunpack.c.l.b16 %v46
    %v127 = vpack.c.b16 %v112, %v111
    %v128 = vpack.c.b16 %v114, %v113
    %v129 = vpack.c.b16 %v116, %v115
    %v130 = vpack.c.b16 %v118, %v117
    %v131 = vpack.c.b16 %v120, %v119
    %v132 = vpack.c.b16 %v122, %v121
    %v133 = vpack.c.b16 %v124, %v123
    %v134 = vpack.c.b16 %v126, %v125
    %143 = vmatpush.bf16.msra.mxu0 %v134
    %144 = vmatpush.bf16.msra.mxu0 %v133
    %145 = vmatpush.bf16.msra.mxu0 %v132
    %146 = vmatpush.bf16.msra.mxu0 %v131
    %147 = vmatpush.bf16.msra.mxu0 %v130
    %148 = vmatpush.bf16.msra.mxu0 %v129
    %149 = vmatpush.bf16.msra.mxu0 %v128
    %150 = vmatpush.bf16.msra.mxu0 %v127
    %151 = vmatmul.bf16.gmra.mxu0 %v79
    %v152 = vpop.f32.mrf.mxu0
    %v153 = vadd.f32 0.0, %v152
    %v154 = vpop.f32.mrf.mxu0
    %v155 = vadd.f32 0.0, %v154
    %156 = vmatmul.bf16.gmra.mxu0 %v80
    %v157 = vpop.f32.mrf.mxu0
    %v158 = vadd.f32 0.0, %v157
    %v159 = vpop.f32.mrf.mxu0
    %v160 = vadd.f32 0.0, %v159
    %161 = vmatmul.bf16.gmra.mxu0 %v81
    %v162 = vpop.f32.mrf.mxu0
    %v163 = vadd.f32 0.0, %v162
    %v164 = vpop.f32.mrf.mxu0
    %v165 = vadd.f32 0.0, %v164
    %166 = vmatmul.bf16.gmra.mxu0 %v82
    %v167 = vpop.f32.mrf.mxu0
    %v168 = vadd.f32 0.0, %v167
    %v169 = vpop.f32.mrf.mxu0
    %v170 = vadd.f32 0.0, %v169
    %171 = vmatmul.bf16.gmra.mxu0 %v83
    %v172 = vpop.f32.mrf.mxu0
    %v173 = vadd.f32 0.0, %v172
    %v174 = vpop.f32.mrf.mxu0
    %v175 = vadd.f32 0.0, %v174
    %176 = vmatmul.bf16.gmra.mxu0 %v84
    %v177 = vpop.f32.mrf.mxu0
    %v178 = vadd.f32 0.0, %v177
    %v179 = vpop.f32.mrf.mxu0
    %v180 = vadd.f32 0.0, %v179
    %181 = vmatmul.bf16.gmra.mxu0 %v85
    %v182 = vpop.f32.mrf.mxu0
    %v183 = vadd.f32 0.0, %v182
    %v184 = vpop.f32.mrf.mxu0
    %v185 = vadd.f32 0.0, %v184
    %186 = vmatmul.bf16.gmra.mxu0 %v86
    %v187 = vpop.f32.mrf.mxu0
    %v188 = vadd.f32 0.0, %v187
    %v189 = vpop.f32.mrf.mxu0
    %v190 = vadd.f32 0.0, %v189
    %191 = vdwg.mxu0
    %v192 = vld [vmem:[%s2] sm:$0xff]
    %v193 = vld [vmem:[%s2 + $0x8] sm:$0xff]
    %v194 = vld [vmem:[%s2 + $0x10] sm:$0xff]
    %v195 = vld [vmem:[%s2 + $0x18] sm:$0xff]
    %v196 = vld [vmem:[%s2 + $0x20] sm:$0xff]
    %v197 = vld [vmem:[%s2 + $0x28] sm:$0xff]
    %v198 = vld [vmem:[%s2 + $0x30] sm:$0xff]
    %v199 = vld [vmem:[%s2 + $0x38] sm:$0xff]
    %v200 = vld [vmem:[%s2 + $0x40] sm:$0xff]
    %v201 = vld [vmem:[%s2 + $0x48] sm:$0xff]
    %v202 = vld [vmem:[%s2 + $0x50] sm:$0xff]
    %v203 = vld [vmem:[%s2 + $0x58] sm:$0xff]
    %v204 = vld [vmem:[%s2 + $0x60] sm:$0xff]
    %v205 = vld [vmem:[%s2 + $0x68] sm:$0xff]
    %v206 = vld [vmem:[%s2 + $0x70] sm:$0xff]
    %v207 = vld [vmem:[%s2 + $0x78] sm:$0xff]
    %209 = vset.pattern.permute.xlu0 0
    %210 = vperm.xlu0 %209, %v192
    %v211 = vpop.permute.xlu0 %210
    %214 = vset.pattern.permute.xlu0 0
    %215 = vperm.xlu0 %214, %v193
    %v216 = vpop.permute.xlu0 %215
    %219 = vset.pattern.permute.xlu0 0
    %220 = vperm.xlu0 %219, %v194
    %v221 = vpop.permute.xlu0 %220
    %224 = vset.pattern.permute.xlu0 0
    %225 = vperm.xlu0 %224, %v195
    %v226 = vpop.permute.xlu0 %225
    %229 = vset.pattern.permute.xlu0 0
    %230 = vperm.xlu0 %229, %v196
    %v231 = vpop.permute.xlu0 %230
    %234 = vset.pattern.permute.xlu0 0
    %235 = vperm.xlu0 %234, %v197
    %v236 = vpop.permute.xlu0 %235
    %239 = vset.pattern.permute.xlu0 0
    %240 = vperm.xlu0 %239, %v198
    %v241 = vpop.permute.xlu0 %240
    %244 = vset.pattern.permute.xlu0 0
    %245 = vperm.xlu0 %244, %v199
    %v246 = vpop.permute.xlu0 %245
    %249 = vset.pattern.permute.xlu0 0
    %250 = vperm.xlu0 %249, %v200
    %v251 = vpop.permute.xlu0 %250
    %254 = vset.pattern.permute.xlu0 0
    %255 = vperm.xlu0 %254, %v201
    %v256 = vpop.permute.xlu0 %255
    %259 = vset.pattern.permute.xlu0 0
    %260 = vperm.xlu0 %259, %v202
    %v261 = vpop.permute.xlu0 %260
    %264 = vset.pattern.permute.xlu0 0
    %265 = vperm.xlu0 %264, %v203
    %v266 = vpop.permute.xlu0 %265
    %269 = vset.pattern.permute.xlu0 0
    %270 = vperm.xlu0 %269, %v204
    %v271 = vpop.permute.xlu0 %270
    %274 = vset.pattern.permute.xlu0 0
    %275 = vperm.xlu0 %274, %v205
    %v276 = vpop.permute.xlu0 %275
    %279 = vset.pattern.permute.xlu0 0
    %280 = vperm.xlu0 %279, %v206
    %v281 = vpop.permute.xlu0 %280
    %284 = vset.pattern.permute.xlu0 0
    %285 = vperm.xlu0 %284, %v207
    %v286 = vpop.permute.xlu0 %285
    %v288 = vmul.f32 %v211, %v153
    %v289 = vmul.f32 %v216, %v155
    %v290 = vmul.f32 %v221, %v158
    %v291 = vmul.f32 %v226, %v160
    %v292 = vmul.f32 %v231, %v163
    %v293 = vmul.f32 %v236, %v165
    %v294 = vmul.f32 %v241, %v168
    %v295 = vmul.f32 %v246, %v170
    %v296 = vmul.f32 %v251, %v173
    %v297 = vmul.f32 %v256, %v175
    %v298 = vmul.f32 %v261, %v178
    %v299 = vmul.f32 %v266, %v180
    %v300 = vmul.f32 %v271, %v183
    %v301 = vmul.f32 %v276, %v185
    %v302 = vmul.f32 %v281, %v188
    %v303 = vmul.f32 %v286, %v190
    %304 = vst [vmem:[#allocation2] sm:$0xff] %v288
    %305 = vst [vmem:[#allocation2 + $0x8] sm:$0xff] %v289
    %306 = vst [vmem:[#allocation2 + $0x10] sm:$0xff] %v290
    %307 = vst [vmem:[#allocation2 + $0x18] sm:$0xff] %v291
    %308 = vst [vmem:[#allocation2 + $0x20] sm:$0xff] %v292
    %309 = vst [vmem:[#allocation2 + $0x28] sm:$0xff] %v293
    %310 = vst [vmem:[#allocation2 + $0x30] sm:$0xff] %v294
    %311 = vst [vmem:[#allocation2 + $0x38] sm:$0xff] %v295
    %312 = vst [vmem:[#allocation2 + $0x40] sm:$0xff] %v296
    %313 = vst [vmem:[#allocation2 + $0x48] sm:$0xff] %v297
    %314 = vst [vmem:[#allocation2 + $0x50] sm:$0xff] %v298
    %315 = vst [vmem:[#allocation2 + $0x58] sm:$0xff] %v299
    %316 = vst [vmem:[#allocation2 + $0x60] sm:$0xff] %v300
    %317 = vst [vmem:[#allocation2 + $0x68] sm:$0xff] %v301
    %318 = vst [vmem:[#allocation2 + $0x70] sm:$0xff] %v302
    %319 = vst [vmem:[#allocation2 + $0x78] sm:$0xff] %v303
    // Predicated region
    $region14: #{tpu_custom_call.1} parent=1 // pred_check
      _
    $region15: #{tpu_custom_call.1} parent=1 // pred_check_branch
      %321 = sbr.rel (0) target = $region17
    $region16: #{tpu_custom_call.1} parent=1 // pred_region
      %323 = vsyncadd [#allocation3], 0
      %s324 = sshll.u32 [#allocation2], 4
      %s325 = int_to_ptr.vmem [resolvable:$true] %s324
      %s326 = sshll.u32 %s3, 4
      %s327 = int_to_ptr.hbm [resolvable:$true] %s326
      %332 = dma.vmem_to_hbm [thread:$0]  %s325, 2048, %s327, [#allocation3], 128, 128, 8
    $region17: #{tpu_custom_call.1} parent=1 // pred_fallthru
      _
    // Predicated region
    $region18: #{tpu_custom_call.1} parent=1 // pred_check
      _
    $region19: #{tpu_custom_call.1} parent=1 // pred_check_branch
      %334 = sbr.rel (0) target = $region21
    $region20: #{tpu_custom_call.1} parent=1 // pred_region
      %336 = dma.done [#allocation3], 2048
    $region21: #{tpu_custom_call.1} parent=1 // pred_fallthru
      _
    %337 = vsyncpa [#allocation3], 1

</llo_original>
